<compile_context>
chip_gen: v7x
topology: tpu7x:2x2x1
jax: 0.10.0
libtpu: 0.0.40
codegen_flags: <defaults>
</compile_context>

<pallas_src>
import jax
import jax.numpy as jnp
from jax.experimental import pallas as pl
from jax.experimental.pallas import tpu as pltpu

_LANES = 128
_MAX_ROWS_PER_STEP = 1024                 # cap on R (128-lane rows per grid step)
_VMEM_BUDGET_BYTES = 12 * 1024 * 1024     # stay under v5e's 16 MiB scoped default


def multi_task_loss(pred_seg, pred_cls, pred_int, mask, intensity):
    """pred_seg: (B,1,H,W) logits, pred_cls: (B,2,H,W) logits, pred_int: (B,1) or (B,),
       mask: (B,1,H,W) in {0,1}, intensity: (B,) targets.
       Returns (total, dice_loss, ce_loss, bce_loss)."""
    B = pred_seg.shape[0]
    hw = pred_seg.shape[-2] * pred_seg.shape[-1]

    # ---- Layout: sublane-dense (B, rows, 128) tiles, native dtype on the wire.
    seg = pred_seg.reshape(B, hw)
    msk = mask.reshape(B, hw)
    if msk.dtype == jnp.bool_:
        msk = msk.astype(jnp.float32)
    cls = pred_cls.reshape(B, 2, hw)

    rows = pl.cdiv(hw, _LANES)
    pad = rows * _LANES - hw
    if pad:
        # Only when H*W isn't 128-aligned (the tile-multiple pad is gone).
        seg = jnp.pad(seg, ((0, 0), (0, pad)))
        msk = jnp.pad(msk, ((0, 0), (0, pad)))
        cls = jnp.pad(cls, ((0, 0), (0, 0), (0, pad)))
    seg = seg.reshape(B, rows, _LANES)
    msk = msk.reshape(B, rows, _LANES)
    cls = cls.reshape(B, 2, rows, _LANES)

    # ---- Tile size: biggest R (multiple of 8) keeping
    #      2x(seg+mask+cls blocks) + 4 f32 accumulators under the VMEM budget.
    bytes_per_row = (2 * 4 + 4) * B * _LANES * 4      # f32 worst case
    r_cap = max(8, min(_MAX_ROWS_PER_STEP,
                       (_VMEM_BUDGET_BYTES // bytes_per_row) // 8 * 8))
    if rows <= r_cap:
        R, n_blk = rows, 1
    else:
        R, n_blk = r_cap, pl.cdiv(rows, r_cap)

    # ---- Two-way split of the row-blocks (one half per TensorCore on v7x;
    #      v5e/v6e iterate both halves serially with negligible overhead).
    num_parts = 2 if n_blk >= 2 else 1
    spp = pl.cdiv(n_blk, num_parts)                   # steps per part
    needs_mask = (num_parts * spp * R * _LANES) != hw

    def row_block(c, i):
        # Clamp so a phantom / ragged trailing block still DMAs in bounds; its
        # contribution is zeroed by the in-kernel validity mask below.
        return jnp.minimum(c * spp + i, n_blk - 1)

    def kernel(seg_ref, mask_ref, cls_ref, out_ref, acc_p, acc_m, acc_pm, acc_ce):
        i = pl.program_id(1)

        @pl.when(i == 0)
        def _():
            acc_p[...] = jnp.zeros_like(acc_p)
            acc_m[...] = jnp.zeros_like(acc_m)
            acc_pm[...] = jnp.zeros_like(acc_pm)
            acc_ce[...] = jnp.zeros_like(acc_ce)

        x = seg_ref[...].astype(jnp.float32)      # (B, R, 128) seg logits
        m = mask_ref[...].astype(jnp.float32)     # (B, R, 128) binary mask
        z = cls_ref[...].astype(jnp.float32)      # (B, 2, R, 128) CE logits
        z0 = z[:, 0]
        z1 = z[:, 1]

        # sigmoid(x) = 0.5*tanh(0.5*x) + 0.5 : one accurate EUP push per elem
        # (vs exp + reciprocal); EUP is the binding compute slot here.
        p = 0.5 * jnp.tanh(0.5 * x) + 0.5
        # 2-class CE: lse - z_true == softplus(z_other - z_true); sign flip as
        # a single mul instead of cmp+select.
        d = (1.0 - 2.0 * m) * (z1 - z0)
        ce = jnp.maximum(d, 0.0) + jnp.log1p(jnp.exp(-jnp.abs(d)))

        if needs_mask:  # static: traced only when a ragged / phantom tail exists
            blk = pl.program_id(0) * spp + i      # un-clamped logical block id
            row = jax.lax.broadcasted_iota(jnp.int32, (B, R, _LANES), 1)
            lane = jax.lax.broadcasted_iota(jnp.int32, (B, R, _LANES), 2)
            valid = (blk * R + row) * _LANES + lane < hw
            p = jnp.where(valid, p, 0.0)
            m = jnp.where(valid, m, 0.0)
            ce = jnp.where(valid, ce, 0.0)

        # vreg-shaped running partials: pure VALU adds per step.
        acc_p[...] += p
        acc_m[...] += m
        acc_pm[...] += p * m
        acc_ce[...] += ce

        @pl.when(i == pl.num_programs(1) - 1)
        def _():
            # Per-part, per-lane partial sums; the tiny cross-lane / cross-part
            # reduction and the loss algebra happen in the wrapper.
            out_ref[0, 0:1, :] = jnp.sum(acc_p[...], axis=(0, 1), keepdims=True)[0]
            out_ref[0, 1:2, :] = jnp.sum(acc_m[...], axis=(0, 1), keepdims=True)[0]
            out_ref[0, 2:3, :] = jnp.sum(acc_pm[...], axis=(0, 1), keepdims=True)[0]
            out_ref[0, 3:4, :] = jnp.sum(acc_ce[...], axis=(0, 1), keepdims=True)[0]

    grid_spec = pltpu.PrefetchScalarGridSpec(
        num_scalar_prefetch=0,
        grid=(num_parts, spp),
        in_specs=[
            pl.BlockSpec((B, R, _LANES), lambda c, i: (0, row_block(c, i), 0)),
            pl.BlockSpec((B, R, _LANES), lambda c, i: (0, row_block(c, i), 0)),
            pl.BlockSpec((B, 2, R, _LANES), lambda c, i: (0, 0, row_block(c, i), 0)),
        ],
        out_specs=pl.BlockSpec((1, 4, _LANES), lambda c, i: (c, 0, 0)),
        scratch_shapes=[pltpu.VMEM((B, R, _LANES), jnp.float32)] * 4,
    )

    bytes_accessed = int(seg.nbytes + msk.nbytes + cls.nbytes
                         + num_parts * 4 * _LANES * 4)
    part_sums = pl.pallas_call(
        kernel,
        out_shape=jax.ShapeDtypeStruct((num_parts, 4, _LANES), jnp.float32),
        grid_spec=grid_spec,
        compiler_params=pltpu.CompilerParams(
            dimension_semantics=("parallel", "arbitrary"),
            vmem_limit_bytes=32 * 1024 * 1024),
        cost_estimate=pl.CostEstimate(
            flops=int(16 * B * rows * _LANES),
            transcendentals=int(3 * B * rows * _LANES),
            bytes_accessed=bytes_accessed),
    )(seg, msk, cls)

    # ---- Wrapper-side combine: O(parts*128) adds + O(1) loss algebra.
    s = jnp.sum(part_sums, axis=(0, 2))       # (4,) = [S_p, S_m, S_pm, S_ce]
    s_p, s_m, s_pm, s_ce = s[0], s[1], s[2], s[3]
    n_el = jnp.float32(B * hw)

    # Dice over the [pos, neg] channel pair (no smoothing eps, as in the ref).
    loss0 = 1.0 - 0.5 * (2.0 * s_pm / (s_p + s_m)
                         + 2.0 * (n_el - s_p - s_m + s_pm) / (2.0 * n_el - s_p - s_m))
    loss1 = s_ce / n_el                       # CE mean over B*H*W pixels

    # BCEWithLogits over the tiny (B,) intensity head: O(B) scalar work kept in
    # the wrapper so the kernel emits raw per-TensorCore partial sums only.
    zb = pred_int.reshape(B).astype(jnp.float32)
    yb = intensity.reshape(B).astype(jnp.float32)
    loss2 = jnp.mean(jnp.maximum(zb, 0.0) - zb * yb + jnp.log1p(jnp.exp(-jnp.abs(zb))))

    total = (loss0 + loss1 + loss2) / 3.0
    return total, loss0, loss1, loss2


if __name__ == "__main__":
    key = jax.random.PRNGKey(0)
    k1, k2, k3, k4, k5 = jax.random.split(key, 5)

    B, H, W = 2, 16, 16
    pred_seg = jax.random.normal(k1, (B, 1, H, W), dtype=jnp.float32)   # preds[0]
    pred_cls = jax.random.normal(k2, (B, 2, H, W), dtype=jnp.float32)   # preds[1]
    pred_int = jax.random.normal(k3, (B, 1), dtype=jnp.float32)         # preds[2]
    mask = jax.random.bernoulli(k4, 0.5, (B, 1, H, W)).astype(jnp.float32)
    intensity = jax.random.bernoulli(k5, 0.5, (B,)).astype(jnp.float32)

    out = multi_task_loss(pred_seg, pred_cls, pred_int, mask, intensity)
    out = jax.block_until_ready(out)

    # Pure-JAX reference (mirrors the PyTorch module with label := mask).
    def ref(pred_seg, pred_cls, pred_int, mask, intensity):
        p = jax.nn.sigmoid(pred_seg.astype(jnp.float32))
        m = mask.astype(jnp.float32)
        n0 = 2.0 * jnp.sum(p * m)
        d0 = jnp.sum(p + m)
        n1 = 2.0 * jnp.sum((1.0 - p) * (1.0 - m))
        d1 = jnp.sum((1.0 - p) + (1.0 - m))
        loss0 = 1.0 - 0.5 * (n0 / d0 + n1 / d1)
        z = pred_cls.astype(jnp.float32)
        lab = mask[:, 0].astype(jnp.int32)
        mx = jnp.max(z, axis=1, keepdims=True)
        lse = mx[:, 0] + jnp.log(jnp.sum(jnp.exp(z - mx), axis=1))
        z_true = jnp.where(lab == 1, z[:, 1], z[:, 0])
        loss1 = jnp.mean(lse - z_true)
        b = pred_int.reshape(-1).astype(jnp.float32)
        y = intensity.reshape(-1).astype(jnp.float32)
        loss2 = jnp.mean(jnp.maximum(b, 0.0) - b * y + jnp.log1p(jnp.exp(-jnp.abs(b))))
        total = (loss0 + loss1 + loss2) / 3.0
        return jnp.stack([total, loss0, loss1, loss2])

    expect = ref(pred_seg, pred_cls, pred_int, mask, intensity)
    got = jnp.stack(list(out))
    assert bool(jnp.allclose(got, expect, rtol=1e-4, atol=1e-4)), (got, expect)
    print("KERNEL_OK")
</pallas_src>

<mosaic_0001>
module attributes {stable_mosaic.version = 11 : i64} {
  func.func @kernel(%arg0: i32, %arg1: i32, %arg2: memref<2x2x128xf32, #tpu.memory_space<vmem>>, %arg3: memref<2x2x128xf32, #tpu.memory_space<vmem>>, %arg4: memref<2x2x2x128xf32, #tpu.memory_space<vmem>>, %arg5: memref<1x4x128xf32, #tpu.memory_space<vmem>>, %arg6: memref<2x2x128xf32, #tpu.memory_space<vmem>>, %arg7: memref<2x2x128xf32, #tpu.memory_space<vmem>>, %arg8: memref<2x2x128xf32, #tpu.memory_space<vmem>>, %arg9: memref<2x2x128xf32, #tpu.memory_space<vmem>>) attributes {dimension_semantics = [#tpu.dimension_semantics<parallel>, #tpu.dimension_semantics<arbitrary>], iteration_bounds = array<i64: 1, 1>, scalar_prefetch = 0 : i64, scratch_operands = 4 : i64, tpu.core_type = #tpu.core_type<tc>, window_params = [{transform_indices = @transform_0, window_bounds = array<i64: 2, 2, 128>}, {transform_indices = @transform_1, window_bounds = array<i64: 2, 2, 128>}, {transform_indices = @transform_2, window_bounds = array<i64: 2, 2, 2, 128>}, {transform_indices = @transform_3, window_bounds = array<i64: 1, 4, 128>}]} {
    %c0_i32 = arith.constant 0 : i32
    %0 = arith.cmpi eq, %arg1, %c0_i32 : i32
    %1 = arith.extui %0 : i1 to i32
    %c0_i32_0 = arith.constant 0 : i32
    %2 = arith.cmpi ne, %1, %c0_i32_0 : i32
    scf.if %2 {
      %cst_42 = arith.constant 0.000000e+00 : f32
      %47 = vector.broadcast %cst_42 : f32 to vector<2x2x128xf32>
      %c0_43 = arith.constant 0 : index
      %c0_44 = arith.constant 0 : index
      %c0_45 = arith.constant 0 : index
      %48 = vector.load %arg6[%c0_43, %c0_44, %c0_45] : memref<2x2x128xf32, #tpu.memory_space<vmem>>, vector<2x2x128xf32>
      tpu.vector_store %arg6[%c0_43, %c0_44, %c0_45], %47 {strides = array<i32>} : memref<2x2x128xf32, #tpu.memory_space<vmem>>, vector<2x2x128xf32>,
      %cst_46 = arith.constant 0.000000e+00 : f32
      %49 = vector.broadcast %cst_46 : f32 to vector<2x2x128xf32>
      %c0_47 = arith.constant 0 : index
      %c0_48 = arith.constant 0 : index
      %c0_49 = arith.constant 0 : index
      %50 = vector.load %arg7[%c0_47, %c0_48, %c0_49] : memref<2x2x128xf32, #tpu.memory_space<vmem>>, vector<2x2x128xf32>
      tpu.vector_store %arg7[%c0_47, %c0_48, %c0_49], %49 {strides = array<i32>} : memref<2x2x128xf32, #tpu.memory_space<vmem>>, vector<2x2x128xf32>,
      %cst_50 = arith.constant 0.000000e+00 : f32
      %51 = vector.broadcast %cst_50 : f32 to vector<2x2x128xf32>
      %c0_51 = arith.constant 0 : index
      %c0_52 = arith.constant 0 : index
      %c0_53 = arith.constant 0 : index
      %52 = vector.load %arg8[%c0_51, %c0_52, %c0_53] : memref<2x2x128xf32, #tpu.memory_space<vmem>>, vector<2x2x128xf32>
      tpu.vector_store %arg8[%c0_51, %c0_52, %c0_53], %51 {strides = array<i32>} : memref<2x2x128xf32, #tpu.memory_space<vmem>>, vector<2x2x128xf32>,
      %cst_54 = arith.constant 0.000000e+00 : f32
      %53 = vector.broadcast %cst_54 : f32 to vector<2x2x128xf32>
      %c0_55 = arith.constant 0 : index
      %c0_56 = arith.constant 0 : index
      %c0_57 = arith.constant 0 : index
      %54 = vector.load %arg9[%c0_55, %c0_56, %c0_57] : memref<2x2x128xf32, #tpu.memory_space<vmem>>, vector<2x2x128xf32>
      tpu.vector_store %arg9[%c0_55, %c0_56, %c0_57], %53 {strides = array<i32>} : memref<2x2x128xf32, #tpu.memory_space<vmem>>, vector<2x2x128xf32>,
    } else {
    }
    %c0 = arith.constant 0 : index
    %c0_1 = arith.constant 0 : index
    %c0_2 = arith.constant 0 : index
    %3 = vector.load %arg2[%c0, %c0_1, %c0_2] : memref<2x2x128xf32, #tpu.memory_space<vmem>>, vector<2x2x128xf32>
    %c0_3 = arith.constant 0 : index
    %c0_4 = arith.constant 0 : index
    %c0_5 = arith.constant 0 : index
    %4 = vector.load %arg3[%c0_3, %c0_4, %c0_5] : memref<2x2x128xf32, #tpu.memory_space<vmem>>, vector<2x2x128xf32>
    %c0_6 = arith.constant 0 : index
    %c0_7 = arith.constant 0 : index
    %c0_8 = arith.constant 0 : index
    %c0_9 = arith.constant 0 : index
    %5 = vector.load %arg4[%c0_6, %c0_7, %c0_8, %c0_9] : memref<2x2x2x128xf32, #tpu.memory_space<vmem>>, vector<2x2x2x128xf32>
    %6 = vector.extract_strided_slice %5 {offsets = [0, 0, 0, 0], sizes = [2, 1, 2, 128], strides = [1, 1, 1, 1]} : vector<2x2x2x128xf32> to vector<2x1x2x128xf32>
    %7 = vector.shape_cast %6 : vector<2x1x2x128xf32> to vector<2x2x128xf32>
    %8 = vector.extract_strided_slice %5 {offsets = [0, 1, 0, 0], sizes = [2, 1, 2, 128], strides = [1, 1, 1, 1]} : vector<2x2x2x128xf32> to vector<2x1x2x128xf32>
    %9 = vector.shape_cast %8 : vector<2x1x2x128xf32> to vector<2x2x128xf32>
    %cst = arith.constant 5.000000e-01 : f32
    %10 = vector.broadcast %cst : f32 to vector<2x2x128xf32>
    %11 = arith.mulf %10, %3 : vector<2x2x128xf32>
    %12 = math.tanh %11 : vector<2x2x128xf32>
    %cst_10 = arith.constant 5.000000e-01 : f32
    %13 = vector.broadcast %cst_10 : f32 to vector<2x2x128xf32>
    %14 = arith.mulf %13, %12 : vector<2x2x128xf32>
    %cst_11 = arith.constant 5.000000e-01 : f32
    %15 = vector.broadcast %cst_11 : f32 to vector<2x2x128xf32>
    %16 = arith.addf %14, %15 : vector<2x2x128xf32>
    %cst_12 = arith.constant 2.000000e+00 : f32
    %17 = vector.broadcast %cst_12 : f32 to vector<2x2x128xf32>
    %18 = arith.mulf %17, %4 : vector<2x2x128xf32>
    %cst_13 = arith.constant 1.000000e+00 : f32
    %19 = vector.broadcast %cst_13 : f32 to vector<2x2x128xf32>
    %20 = arith.subf %19, %18 : vector<2x2x128xf32>
    %21 = arith.subf %9, %7 : vector<2x2x128xf32>
    %22 = arith.mulf %20, %21 : vector<2x2x128xf32>
    %cst_14 = arith.constant 0.000000e+00 : f32
    %23 = vector.broadcast %cst_14 : f32 to vector<2x2x128xf32>
    %24 = arith.maximumf %22, %23 : vector<2x2x128xf32>
    %25 = math.absf %22 : vector<2x2x128xf32>
    %cst_15 = arith.constant 0.000000e+00 : f32
    %26 = vector.broadcast %cst_15 : f32 to vector<2x2x128xf32>
    %27 = arith.subf %26, %25 : vector<2x2x128xf32>
    %28 = math.exp %27 : vector<2x2x128xf32>
    %29 = math.log1p %28 : vector<2x2x128xf32>
    %30 = arith.addf %24, %29 : vector<2x2x128xf32>
    %c0_16 = arith.constant 0 : index
    %c0_17 = arith.constant 0 : index
    %c0_18 = arith.constant 0 : index
    %31 = vector.load %arg6[%c0_16, %c0_17, %c0_18] : memref<2x2x128xf32, #tpu.memory_space<vmem>>, vector<2x2x128xf32>
    %32 = arith.addf %31, %16 : vector<2x2x128xf32>
    %c0_19 = arith.constant 0 : index
    %c0_20 = arith.constant 0 : index
    %c0_21 = arith.constant 0 : index
    %33 = vector.load %arg6[%c0_19, %c0_20, %c0_21] : memref<2x2x128xf32, #tpu.memory_space<vmem>>, vector<2x2x128xf32>
    tpu.vector_store %arg6[%c0_19, %c0_20, %c0_21], %32 {strides = array<i32>} : memref<2x2x128xf32, #tpu.memory_space<vmem>>, vector<2x2x128xf32>,
    %c0_22 = arith.constant 0 : index
    %c0_23 = arith.constant 0 : index
    %c0_24 = arith.constant 0 : index
    %34 = vector.load %arg7[%c0_22, %c0_23, %c0_24] : memref<2x2x128xf32, #tpu.memory_space<vmem>>, vector<2x2x128xf32>
    %35 = arith.addf %34, %4 : vector<2x2x128xf32>
    %c0_25 = arith.constant 0 : index
    %c0_26 = arith.constant 0 : index
    %c0_27 = arith.constant 0 : index
    %36 = vector.load %arg7[%c0_25, %c0_26, %c0_27] : memref<2x2x128xf32, #tpu.memory_space<vmem>>, vector<2x2x128xf32>
    tpu.vector_store %arg7[%c0_25, %c0_26, %c0_27], %35 {strides = array<i32>} : memref<2x2x128xf32, #tpu.memory_space<vmem>>, vector<2x2x128xf32>,
    %c0_28 = arith.constant 0 : index
    %c0_29 = arith.constant 0 : index
    %c0_30 = arith.constant 0 : index
    %37 = vector.load %arg8[%c0_28, %c0_29, %c0_30] : memref<2x2x128xf32, #tpu.memory_space<vmem>>, vector<2x2x128xf32>
    %38 = arith.mulf %16, %4 : vector<2x2x128xf32>
    %39 = arith.addf %37, %38 : vector<2x2x128xf32>
    %c0_31 = arith.constant 0 : index
    %c0_32 = arith.constant 0 : index
    %c0_33 = arith.constant 0 : index
    %40 = vector.load %arg8[%c0_31, %c0_32, %c0_33] : memref<2x2x128xf32, #tpu.memory_space<vmem>>, vector<2x2x128xf32>
    tpu.vector_store %arg8[%c0_31, %c0_32, %c0_33], %39 {strides = array<i32>} : memref<2x2x128xf32, #tpu.memory_space<vmem>>, vector<2x2x128xf32>,
    %c0_34 = arith.constant 0 : index
    %c0_35 = arith.constant 0 : index
    %c0_36 = arith.constant 0 : index
    %41 = vector.load %arg9[%c0_34, %c0_35, %c0_36] : memref<2x2x128xf32, #tpu.memory_space<vmem>>, vector<2x2x128xf32>
    %42 = arith.addf %41, %30 : vector<2x2x128xf32>
    %c0_37 = arith.constant 0 : index
    %c0_38 = arith.constant 0 : index
    %c0_39 = arith.constant 0 : index
    %43 = vector.load %arg9[%c0_37, %c0_38, %c0_39] : memref<2x2x128xf32, #tpu.memory_space<vmem>>, vector<2x2x128xf32>
    tpu.vector_store %arg9[%c0_37, %c0_38, %c0_39], %42 {strides = array<i32>} : memref<2x2x128xf32, #tpu.memory_space<vmem>>, vector<2x2x128xf32>,
    %c0_i32_40 = arith.constant 0 : i32
    %44 = arith.cmpi eq, %arg1, %c0_i32_40 : i32
    %45 = arith.extui %44 : i1 to i32
    %c0_i32_41 = arith.constant 0 : i32
    %46 = arith.cmpi ne, %45, %c0_i32_41 : i32
    scf.if %46 {
      %c0_42 = arith.constant 0 : index
      %c0_43 = arith.constant 0 : index
      %c0_44 = arith.constant 0 : index
      %47 = vector.load %arg6[%c0_42, %c0_43, %c0_44] : memref<2x2x128xf32, #tpu.memory_space<vmem>>, vector<2x2x128xf32>
      %cst_45 = arith.constant dense<0.000000e+00> : vector<128xf32>
      %48 = vector.multi_reduction <add>, %47, %cst_45 [0, 1] : vector<2x2x128xf32> to vector<128xf32>
      %49 = vector.shape_cast %48 : vector<128xf32> to vector<1x1x128xf32>
      %50 = vector.shape_cast %49 : vector<1x1x128xf32> to vector<1x128xf32>
      %c0_46 = arith.constant 0 : index
      %c0_47 = arith.constant 0 : index
      %c0_48 = arith.constant 0 : index
      %51 = vector.load %arg5[%c0_46, %c0_47, %c0_48] : memref<1x4x128xf32, #tpu.memory_space<vmem>>, vector<1x1x128xf32>
      %52 = vector.shape_cast %51 : vector<1x1x128xf32> to vector<1x128xf32>
      %53 = vector.shape_cast %50 : vector<1x128xf32> to vector<1x1x128xf32>
      tpu.vector_store %arg5[%c0_46, %c0_47, %c0_48], %53 {strides = array<i32>} : memref<1x4x128xf32, #tpu.memory_space<vmem>>, vector<1x1x128xf32>,
      %c0_49 = arith.constant 0 : index
      %c0_50 = arith.constant 0 : index
      %c0_51 = arith.constant 0 : index
      %54 = vector.load %arg7[%c0_49, %c0_50, %c0_51] : memref<2x2x128xf32, #tpu.memory_space<vmem>>, vector<2x2x128xf32>
      %cst_52 = arith.constant dense<0.000000e+00> : vector<128xf32>
      %55 = vector.multi_reduction <add>, %54, %cst_52 [0, 1] : vector<2x2x128xf32> to vector<128xf32>
      %56 = vector.shape_cast %55 : vector<128xf32> to vector<1x1x128xf32>
      %57 = vector.shape_cast %56 : vector<1x1x128xf32> to vector<1x128xf32>
      %c0_53 = arith.constant 0 : index
      %c1 = arith.constant 1 : index
      %c0_54 = arith.constant 0 : index
      %58 = vector.load %arg5[%c0_53, %c1, %c0_54] : memref<1x4x128xf32, #tpu.memory_space<vmem>>, vector<1x1x128xf32>
      %59 = vector.shape_cast %58 : vector<1x1x128xf32> to vector<1x128xf32>
      %60 = vector.shape_cast %57 : vector<1x128xf32> to vector<1x1x128xf32>
      tpu.vector_store %arg5[%c0_53, %c1, %c0_54], %60 {strides = array<i32>} : memref<1x4x128xf32, #tpu.memory_space<vmem>>, vector<1x1x128xf32>,
      %c0_55 = arith.constant 0 : index
      %c0_56 = arith.constant 0 : index
      %c0_57 = arith.constant 0 : index
      %61 = vector.load %arg8[%c0_55, %c0_56, %c0_57] : memref<2x2x128xf32, #tpu.memory_space<vmem>>, vector<2x2x128xf32>
      %cst_58 = arith.constant dense<0.000000e+00> : vector<128xf32>
      %62 = vector.multi_reduction <add>, %61, %cst_58 [0, 1] : vector<2x2x128xf32> to vector<128xf32>
      %63 = vector.shape_cast %62 : vector<128xf32> to vector<1x1x128xf32>
      %64 = vector.shape_cast %63 : vector<1x1x128xf32> to vector<1x128xf32>
      %c0_59 = arith.constant 0 : index
      %c2 = arith.constant 2 : index
      %c0_60 = arith.constant 0 : index
      %65 = vector.load %arg5[%c0_59, %c2, %c0_60] : memref<1x4x128xf32, #tpu.memory_space<vmem>>, vector<1x1x128xf32>
      %66 = vector.shape_cast %65 : vector<1x1x128xf32> to vector<1x128xf32>
      %67 = vector.shape_cast %64 : vector<1x128xf32> to vector<1x1x128xf32>
      tpu.vector_store %arg5[%c0_59, %c2, %c0_60], %67 {strides = array<i32>} : memref<1x4x128xf32, #tpu.memory_space<vmem>>, vector<1x1x128xf32>,
      %c0_61 = arith.constant 0 : index
      %c0_62 = arith.constant 0 : index
      %c0_63 = arith.constant 0 : index
      %68 = vector.load %arg9[%c0_61, %c0_62, %c0_63] : memref<2x2x128xf32, #tpu.memory_space<vmem>>, vector<2x2x128xf32>
      %cst_64 = arith.constant dense<0.000000e+00> : vector<128xf32>
      %69 = vector.multi_reduction <add>, %68, %cst_64 [0, 1] : vector<2x2x128xf32> to vector<128xf32>
      %70 = vector.shape_cast %69 : vector<128xf32> to vector<1x1x128xf32>
      %71 = vector.shape_cast %70 : vector<1x1x128xf32> to vector<1x128xf32>
      %c0_65 = arith.constant 0 : index
      %c3 = arith.constant 3 : index
      %c0_66 = arith.constant 0 : index
      %72 = vector.load %arg5[%c0_65, %c3, %c0_66] : memref<1x4x128xf32, #tpu.memory_space<vmem>>, vector<1x1x128xf32>
      %73 = vector.shape_cast %72 : vector<1x1x128xf32> to vector<1x128xf32>
      %74 = vector.shape_cast %71 : vector<1x128xf32> to vector<1x1x128xf32>
      tpu.vector_store %arg5[%c0_65, %c3, %c0_66], %74 {strides = array<i32>} : memref<1x4x128xf32, #tpu.memory_space<vmem>>, vector<1x1x128xf32>,
    } else {
    }
    return
  }
  func.func @transform_0(%arg0: i32, %arg1: i32) -> (i32, i32, i32) {
    %c1_i32 = arith.constant 1 : i32
    %0 = arith.muli %arg0, %c1_i32 : i32
    %1 = arith.addi %0, %arg1 : i32
    %c0_i32 = arith.constant 0 : i32
    %2 = arith.minsi %1, %c0_i32 : i32
    %c0_i32_0 = arith.constant 0 : i32
    %c0_i32_1 = arith.constant 0 : i32
    %c0_i32_2 = arith.constant 0 : i32
    return %c0_i32_0, %2, %c0_i32_1 : i32, i32, i32
  }
  func.func @transform_1(%arg0: i32, %arg1: i32) -> (i32, i32, i32) {
    %c1_i32 = arith.constant 1 : i32
    %0 = arith.muli %arg0, %c1_i32 : i32
    %1 = arith.addi %0, %arg1 : i32
    %c0_i32 = arith.constant 0 : i32
    %2 = arith.minsi %1, %c0_i32 : i32
    %c0_i32_0 = arith.constant 0 : i32
    %c0_i32_1 = arith.constant 0 : i32
    %c0_i32_2 = arith.constant 0 : i32
    return %c0_i32_0, %2, %c0_i32_1 : i32, i32, i32
  }
  func.func @transform_2(%arg0: i32, %arg1: i32) -> (i32, i32, i32, i32) {
    %c1_i32 = arith.constant 1 : i32
    %0 = arith.muli %arg0, %c1_i32 : i32
    %1 = arith.addi %0, %arg1 : i32
    %c0_i32 = arith.constant 0 : i32
    %2 = arith.minsi %1, %c0_i32 : i32
    %c0_i32_0 = arith.constant 0 : i32
    %c0_i32_1 = arith.constant 0 : i32
    %c0_i32_2 = arith.constant 0 : i32
    %c0_i32_3 = arith.constant 0 : i32
    return %c0_i32_0, %c0_i32_1, %2, %c0_i32_2 : i32, i32, i32, i32
  }
  func.func @transform_3(%arg0: i32, %arg1: i32) -> (i32, i32, i32) {
    %c0_i32 = arith.constant 0 : i32
    %c0_i32_0 = arith.constant 0 : i32
    %c0_i32_1 = arith.constant 0 : i32
    return %arg0, %c0_i32, %c0_i32_0 : i32, i32, i32
  }
}

</mosaic_0001>

<llo_original>
// kernel: tpu_custom_call.1
$region0: #{tpu_custom_call.1}
  #allocation0 [shape = 'u32[]', space=smem, size = 0x4, offset = 0x4, fixed_abs, tag = 'smem constant byte address 0x4 - core index']
  #allocation1 [shape = 'u32[144,128]{1,0:T(1,128)}', space=vmem, size = 0x12000, scoped, tag = 'internal scratch']
  #allocation2 [shape = 'f32[2,2,128]{2,1,0:T(2,128)}', space=vmem, size = 0x800, scoped, tag = 'scratch operand']
  #allocation3 [shape = 'f32[2,2,128]{2,1,0:T(2,128)}', space=vmem, size = 0x800, scoped, tag = 'scratch operand']
  #allocation4 [shape = 'f32[2,2,128]{2,1,0:T(2,128)}', space=vmem, size = 0x800, scoped, tag = 'scratch operand']
  #allocation5 [shape = 'f32[2,2,128]{2,1,0:T(2,128)}', space=vmem, size = 0x800, scoped, tag = 'scratch operand']
  %s0 = inlined_call_operand.hbm [shape: f32[2,2,128], index: 0, kind: input, shape index: {}]
  %s1 = inlined_call_operand.hbm [shape: f32[2,2,128], index: 1, kind: input, shape index: {}]
  %s2 = inlined_call_operand.hbm [shape: f32[2,2,2,128], index: 2, kind: input, shape index: {}]
  %s3 = inlined_call_operand.hbm [shape: f32[1,4,128], index: 3, kind: output, shape index: {}]
  %s4 = sld [smem:[#allocation0]]
  $region42: #{tpu_custom_call.1} parent=0
    _
  %s6 = ssub.s32 1, %s4
  %s7 = scalar_select 0, %s6, %s4
  $region1: #{tpu_custom_call.1} parent=0
    #allocation6 [shape = 'u8[2048]{0}', space=vmem, size = 0x800, scoped, tag = 'input window, operand 0, single buffered']
    #allocation7 [shape = 's32[1]{0}', space=sflag, size = 0x4, scoped, tag = 'scoped memory for tpu_custom_call.1']
    #allocation8 [shape = 's32[1]{0}', space=sflag, size = 0x4, scoped, tag = 'scoped memory for tpu_custom_call.1']
    #allocation9 [shape = 'u8[2048]{0}', space=vmem, size = 0x800, scoped, tag = 'input window, operand 1, single buffered']
    #allocation10 [shape = 's32[1]{0}', space=sflag, size = 0x4, scoped, tag = 'scoped memory for tpu_custom_call.1']
    #allocation11 [shape = 'u8[4096]{0}', space=vmem, size = 0x1000, scoped, tag = 'input window, operand 2, single buffered']
    #allocation12 [shape = 'u8[2048]{0}', space=vmem, size = 0x800, scoped, tag = 'output window, operand 0, single buffered']
    %8 = vsyncpa [#allocation7], 0
    %9 = vsyncpa [#allocation10], 0
    %10 = vsyncpa [#allocation8], 0
    // Predicated region
    $region2: #{tpu_custom_call.1} parent=1 // pred_check
      _
    $region3: #{tpu_custom_call.1} parent=1 // pred_check_branch
      %12 = sbr.rel (0) target = $region5
    $region4: #{tpu_custom_call.1} parent=1 // pred_region
      %s13 = sadd.s32 0, 0
      %p14 = scmp.lt.s32.totalorder %s13, 0
      %s15 = scalar_select %p14, %s13, 0
      %s17 = ssub.s32 64, 64
      %18 = vsyncadd [#allocation7], %s17
      %s19 = smul.addr %s15, 32
      %s20 = scalar_lea.hbm %s0, %s19
      %s21 = sshll.u32 [#allocation6], 4
      %s22 = int_to_ptr.vmem [resolvable:$true] %s21
      %27 = dma.hbm_to_vmem [thread:$0]  %s20, 64, %s22, [#allocation7], 32, 32, 2
    $region5: #{tpu_custom_call.1} parent=1 // pred_fallthru
      _
    // Predicated region
    $region6: #{tpu_custom_call.1} parent=1 // pred_check
      _
    $region7: #{tpu_custom_call.1} parent=1 // pred_check_branch
      %29 = sbr.rel (0) target = $region9
    $region8: #{tpu_custom_call.1} parent=1 // pred_region
      %s30 = sadd.s32 0, 0
      %p31 = scmp.lt.s32.totalorder %s30, 0
      %s32 = scalar_select %p31, %s30, 0
      %s34 = ssub.s32 64, 64
      %35 = vsyncadd [#allocation10], %s34
      %s36 = smul.addr %s32, 32
      %s37 = scalar_lea.hbm %s1, %s36
      %s38 = sshll.u32 [#allocation9], 4
      %s39 = int_to_ptr.vmem [resolvable:$true] %s38
      %44 = dma.hbm_to_vmem [thread:$0]  %s37, 64, %s39, [#allocation10], 32, 32, 2
    $region9: #{tpu_custom_call.1} parent=1 // pred_fallthru
      _
    // Predicated region
    $region10: #{tpu_custom_call.1} parent=1 // pred_check
      _
    $region11: #{tpu_custom_call.1} parent=1 // pred_check_branch
      %46 = sbr.rel (0) target = $region13
    $region12: #{tpu_custom_call.1} parent=1 // pred_region
      %s47 = sadd.s32 0, 0
      %p48 = scmp.lt.s32.totalorder %s47, 0
      %s49 = scalar_select %p48, %s47, 0
      %s51 = ssub.s32 128, 128
      %52 = vsyncadd [#allocation10], %s51
      %s53 = smul.addr %s49, 32
      %s54 = scalar_lea.hbm %s2, %s53
      %s55 = sshll.u32 [#allocation11], 4
      %s56 = int_to_ptr.vmem [resolvable:$true] %s55
      %61 = dma.hbm_to_vmem [thread:$0]  %s54, 128, %s56, [#allocation10], 32, 32, 2
    $region13: #{tpu_custom_call.1} parent=1 // pred_fallthru
      _
    // Predicated region
    $region14: #{tpu_custom_call.1} parent=1 // pred_check
      _
    $region15: #{tpu_custom_call.1} parent=1 // pred_check_branch
      %63 = sbr.rel (0) target = $region17
    $region16: #{tpu_custom_call.1} parent=1 // pred_region
      %64 = dma.done [#allocation7], 64
    $region17: #{tpu_custom_call.1} parent=1 // pred_fallthru
      _
    // Predicated region
    $region18: #{tpu_custom_call.1} parent=1 // pred_check
      _
    $region19: #{tpu_custom_call.1} parent=1 // pred_check_branch
      %66 = sbr.rel (0) target = $region21
    $region20: #{tpu_custom_call.1} parent=1 // pred_region
      %67 = dma.done [#allocation10], 64
    $region21: #{tpu_custom_call.1} parent=1 // pred_fallthru
      _
    // Predicated region
    $region22: #{tpu_custom_call.1} parent=1 // pred_check
      _
    $region23: #{tpu_custom_call.1} parent=1 // pred_check_branch
      %69 = sbr.rel (0) target = $region25
    $region24: #{tpu_custom_call.1} parent=1 // pred_region
      %70 = dma.done [#allocation10], 128
    $region25: #{tpu_custom_call.1} parent=1 // pred_fallthru
      _
    %s71 = sadd.s32 0, 0
    %p72 = scmp.lt.s32.totalorder %s71, 0
    %s73 = scalar_select %p72, %s71, 0
    %s74 = sadd.s32 0, 0
    %p75 = scmp.lt.s32.totalorder %s74, 0
    %s76 = scalar_select %p75, %s74, 0
    %s77 = sadd.s32 0, 0
    %p78 = scmp.lt.s32.totalorder %s77, 0
    %s79 = scalar_select %p78, %s77, 0
    %p80 = scmp.eq.s32.totalorder 0, 0
    // Predicated region
    $region26: #{tpu_custom_call.1} parent=1 // pred_check
      %p81 = pneg %p80
    $region27: #{tpu_custom_call.1} parent=1 // pred_check_branch
      %83 = sbr.rel (%p81) target = $region29
    $region28: #{tpu_custom_call.1} parent=1 // pred_region
      %84 = vst [vmem:[#allocation2] sm:$0x3] 0.0
      %85 = vst [vmem:[#allocation2 + $0x2] sm:$0x3] 0.0
      %86 = vst [vmem:[#allocation3] sm:$0x3] 0.0
      %87 = vst [vmem:[#allocation3 + $0x2] sm:$0x3] 0.0
      %88 = vst [vmem:[#allocation4] sm:$0x3] 0.0
      %89 = vst [vmem:[#allocation4 + $0x2] sm:$0x3] 0.0
      %90 = vst [vmem:[#allocation5] sm:$0x3] 0.0
      %91 = vst [vmem:[#allocation5 + $0x2] sm:$0x3] 0.0
    $region29: #{tpu_custom_call.1} parent=1 // pred_fallthru
      _
    %v92 = vld [vmem:[#allocation6] sm:$0x3]
    %v93 = vld [vmem:[#allocation6 + $0x2] sm:$0x3]
    %v94 = vld [vmem:[#allocation9] sm:$0x3]
    %v95 = vld [vmem:[#allocation9 + $0x2] sm:$0x3]
    %v96 = vld [vmem:[#allocation11] sm:$0x3]
    %v97 = vld [vmem:[#allocation11 + $0x2] sm:$0x3]
    %v98 = vld [vmem:[#allocation11 + $0x4] sm:$0x3]
    %v99 = vld [vmem:[#allocation11 + $0x6] sm:$0x3]
    %v100 = vmul.f32 %v92, 0.5
    %v101 = vmul.f32 %v93, 0.5
    %v102 = vtanh.pop %v100
    %v103 = vtanh.pop %v101
    %v104 = vmul.f32 %v102, 0.5
    %v105 = vmul.f32 %v103, 0.5
    %v106 = vadd.f32 %v104, 0.5
    %v107 = vadd.f32 %v105, 0.5
    %v108 = vmul.f32 %v94, 2.0
    %v109 = vmul.f32 %v95, 2.0
    %v110 = vsub.f32 1.0, %v108
    %v111 = vsub.f32 1.0, %v109
    %v112 = vsub.f32 %v97, %v96
    %v113 = vsub.f32 %v99, %v98
    %v114 = vmul.f32 %v110, %v112
    %v115 = vmul.f32 %v111, %v113
    %v116 = vmax.f32 %v114, 0.0
    %v117 = vmax.f32 %v115, 0.0
    %v118 = vand.u32 2147483647, %v114
    %v119 = vand.u32 2147483647, %v115
    %v120 = vsub.f32 0.0, %v118
    %v121 = vsub.f32 0.0, %v119
    %v122 = vmul.f32 %v120, 1.442695
    %v123 = vpow.pop %v122
    %v124 = vmul.f32 %v121, 1.442695
    %v125 = vpow.pop %v124
    %v126 = vadd.f32 %v123, 1.0
    %v127 = vlog2.pop %v126
    %v128 = vmul.f32 %v127, 0.6931472
    %v129 = vmul.f32 -0.5, %v123
    %v130 = vadd.f32 %v129, 1.0
    %v131 = vmul.f32 %v130, %v123
    %v132 = vand.u32 2147483647, %v123
    %vm133 = vcmp.lt.f32.partialorder %v132, 0.0004427343
    %v134 = vsel %vm133, %v131, %v128
    %v135 = vadd.f32 %v125, 1.0
    %v136 = vlog2.pop %v135
    %v137 = vmul.f32 %v136, 0.6931472
    %v138 = vmul.f32 -0.5, %v125
    %v139 = vadd.f32 %v138, 1.0
    %v140 = vmul.f32 %v139, %v125
    %v141 = vand.u32 2147483647, %v125
    %vm142 = vcmp.lt.f32.partialorder %v141, 0.0004427343
    %v143 = vsel %vm142, %v140, %v137
    %v144 = vadd.f32 %v116, %v134
    %v145 = vadd.f32 %v117, %v143
    %v146 = vld [vmem:[#allocation2] sm:$0x3]
    %v147 = vld [vmem:[#allocation2 + $0x2] sm:$0x3]
    %v148 = vadd.f32 %v146, %v106
    %v149 = vadd.f32 %v147, %v107
    %150 = vst [vmem:[#allocation2] sm:$0x3] %v148
    %151 = vst [vmem:[#allocation2 + $0x2] sm:$0x3] %v149
    %v152 = vld [vmem:[#allocation3] sm:$0x3]
    %v153 = vld [vmem:[#allocation3 + $0x2] sm:$0x3]
    %v154 = vadd.f32 %v152, %v94
    %v155 = vadd.f32 %v153, %v95
    %156 = vst [vmem:[#allocation3] sm:$0x3] %v154
    %157 = vst [vmem:[#allocation3 + $0x2] sm:$0x3] %v155
    %v158 = vld [vmem:[#allocation4] sm:$0x3]
    %v159 = vld [vmem:[#allocation4 + $0x2] sm:$0x3]
    %v160 = vmul.f32 %v106, %v94
    %v161 = vmul.f32 %v107, %v95
    %v162 = vadd.f32 %v158, %v160
    %v163 = vadd.f32 %v159, %v161
    %164 = vst [vmem:[#allocation4] sm:$0x3] %v162
    %165 = vst [vmem:[#allocation4 + $0x2] sm:$0x3] %v163
    %v166 = vld [vmem:[#allocation5] sm:$0x3]
    %v167 = vld [vmem:[#allocation5 + $0x2] sm:$0x3]
    %v168 = vadd.f32 %v166, %v144
    %v169 = vadd.f32 %v167, %v145
    %170 = vst [vmem:[#allocation5] sm:$0x3] %v168
    %171 = vst [vmem:[#allocation5 + $0x2] sm:$0x3] %v169
    // Predicated region
    $region30: #{tpu_custom_call.1} parent=1 // pred_check
      %p172 = pneg %p80
    $region31: #{tpu_custom_call.1} parent=1 // pred_check_branch
      %174 = sbr.rel (%p172) target = $region33
    $region32: #{tpu_custom_call.1} parent=1 // pred_region
      %v175 = vld [vmem:[#allocation2] sm:$0x3]
      %v176 = vld [vmem:[#allocation2 + $0x2] sm:$0x3]
      %vm177 = vcmask 1041408
      %v178 = vsel %vm177, %v175, 0.0
      %v179 = vsel %vm177, %v176, 0.0
      %v180 = vadd.f32 %v178, %v179
      %v181 = vrot.slane %v180, 4
      %v182 = vadd.f32 %v180, %v181
      %v183 = vrot.slane %v182, 2
      %v184 = vadd.f32 %v182, %v183
      %v185 = vrot.slane %v184, 1
      %v186 = vadd.f32 %v184, %v185
      %187 = vst [vmem:[#allocation12] sm:$0x1] %v186
      %v188 = vld [vmem:[#allocation3] sm:$0x3]
      %v189 = vld [vmem:[#allocation3 + $0x2] sm:$0x3]
      %v190 = vsel %vm177, %v188, 0.0
      %v191 = vsel %vm177, %v189, 0.0
      %v192 = vadd.f32 %v190, %v191
      %v193 = vrot.slane %v192, 4
      %v194 = vadd.f32 %v192, %v193
      %v195 = vrot.slane %v194, 2
      %v196 = vadd.f32 %v194, %v195
      %v197 = vrot.slane %v196, 1
      %v198 = vadd.f32 %v196, %v197
      %199 = vst [vmem:[#allocation12 + $0x1] sm:$0x1] %v198
      %v200 = vld [vmem:[#allocation4] sm:$0x3]
      %v201 = vld [vmem:[#allocation4 + $0x2] sm:$0x3]
      %v202 = vsel %vm177, %v200, 0.0
      %v203 = vsel %vm177, %v201, 0.0
      %v204 = vadd.f32 %v202, %v203
      %v205 = vrot.slane %v204, 4
      %v206 = vadd.f32 %v204, %v205
      %v207 = vrot.slane %v206, 2
      %v208 = vadd.f32 %v206, %v207
      %v209 = vrot.slane %v208, 1
      %v210 = vadd.f32 %v208, %v209
      %211 = vst [vmem:[#allocation12 + $0x2] sm:$0x1] %v210
      %v212 = vld [vmem:[#allocation5] sm:$0x3]
      %v213 = vld [vmem:[#allocation5 + $0x2] sm:$0x3]
      %v214 = vsel %vm177, %v212, 0.0
      %v215 = vsel %vm177, %v213, 0.0
      %v216 = vadd.f32 %v214, %v215
      %v217 = vrot.slane %v216, 4
      %v218 = vadd.f32 %v216, %v217
      %v219 = vrot.slane %v218, 2
      %v220 = vadd.f32 %v218, %v219
      %v221 = vrot.slane %v220, 1
      %v222 = vadd.f32 %v220, %v221
      %223 = vst [vmem:[#allocation12 + $0x3] sm:$0x1] %v222
    $region33: #{tpu_custom_call.1} parent=1 // pred_fallthru
      _
    // Predicated region
    $region34: #{tpu_custom_call.1} parent=1 // pred_check
      _
    $region35: #{tpu_custom_call.1} parent=1 // pred_check_branch
      %225 = sbr.rel (0) target = $region37
    $region36: #{tpu_custom_call.1} parent=1 // pred_region
      %s227 = ssub.s32 64, 64
      %228 = vsyncadd [#allocation8], %s227
      %s230 = sshll.u32 [#allocation12], 4
      %s231 = int_to_ptr.vmem [resolvable:$true] %s230
      %233 = dma.vmem_to_hbm [thread:$0]  %s231, 64, %s3, [#allocation8]
    $region37: #{tpu_custom_call.1} parent=1 // pred_fallthru
      _
    // Predicated region
    $region38: #{tpu_custom_call.1} parent=1 // pred_check
      _
    $region39: #{tpu_custom_call.1} parent=1 // pred_check_branch
      %235 = sbr.rel (0) target = $region41
    $region40: #{tpu_custom_call.1} parent=1 // pred_region
      %236 = dma.done [#allocation8], 64
    $region41: #{tpu_custom_call.1} parent=1 // pred_fallthru
      _
    %237 = vsyncpa [#allocation7], 1
    %238 = vsyncpa [#allocation10], 1
    %239 = vsyncpa [#allocation8], 1

</llo_original>
